<compile_context>
chip_gen: v7x
topology: tpu7x:2x2x1
jax: 0.10.0
libtpu: 0.0.40
codegen_flags: <defaults>
</compile_context>

<pallas_src>
import numpy as np
import jax
import jax.numpy as jnp
from jax import lax
from jax.experimental import pallas as pl
from jax.experimental.pallas import tpu as pltpu

N_INPUT = 64                     # 8 channels * 8 length
N_CONV1_IN = 8
N_CONV1_OUT = 16
KERNEL = 3
L_IN = 8
L_OUT = L_IN - KERNEL + 1        # 6
CONV_FLAT = N_CONV1_OUT * L_OUT  # 96
N_HID = 32
N_STAGE1 = N_HID + CONV_FLAT     # 128 = [vfc_1 | toeplitz-conv] fused
N_STAGE2 = N_HID + 1             # 33  = [pfc_1 | vfc_2] fused (block-diagonal)
N_POLICY = 4
OUT_ROWS = 8                     # transposed output rows: [v, logp(4), pad(3)]
NEG_SLOPE = 0.01


def _round_up(x, m):
    return (x + m - 1) // m * m


def _leaky(z):
    return jnp.where(z >= 0, z, NEG_SLOPE * z)


# --------------------------------------------------------------------------
# Kernel: one batch tile (TB rows) per grid step.
# --------------------------------------------------------------------------
def outblock_kernel(x_ref, w1_ref, b1_ref, w2_ref, b2_ref, w3t_ref, b3t_ref,
                    out_ref):
    x = x_ref[...]                                           # (TB, 64), as stored
    if x.dtype != w1_ref.dtype:
        x = x.astype(w1_ref.dtype)                           # in-kernel cast (cheap)

    # Stage 1 (fused): [vfc_1 | Conv1d-as-Toeplitz]  64 -> 128.
    # Epilogue (bias + leaky) runs in b1's dtype (bf16 on v6e/v7x, f32 on v5e).
    h = _leaky(jnp.dot(x, w1_ref[...], preferred_element_type=b1_ref.dtype)
               + b1_ref[...])                                # (TB, 128)

    # Stage 2 (fused block-diagonal): [pfc_1 | vfc_2]  128 -> 33, f32 epilogue.
    if h.dtype != w2_ref.dtype:
        h = h.astype(w2_ref.dtype)
    g = _leaky(jnp.dot(h, w2_ref[...], preferred_element_type=jnp.float32)
               + b2_ref[...])                                # (TB, 33) f32

    # Stage 3, emitted transposed (batch along lanes) so stores are lane-dense:
    #   z[r, b] = sum_k w3t[r, k] * g[b, k]
    #   row 0 = v (pass-through of g[:, 32]); rows 1..4 = pfc_2 logits; 5..7 = 0.
    z = lax.dot_general(w3t_ref[...], g, (((1,), (1,)), ((), ())),
                        preferred_element_type=jnp.float32) + b3t_ref[...]  # (8, TB)

    # Masked log_softmax over the 4 logit rows only (sublane-axis reduction).
    row = lax.broadcasted_iota(jnp.int32, z.shape, 0)
    is_logit = (row >= 1) & (row < 1 + N_POLICY)
    zl = jnp.where(is_logit, z, -jnp.inf)
    m = jnp.max(zl, axis=0, keepdims=True)                   # (1, TB)
    lse = m + jnp.log(jnp.sum(jnp.exp(zl - m), axis=0, keepdims=True))
    out_ref[...] = jnp.where(is_logit, z - lse, z)           # (8, TB) unmasked stores


# --------------------------------------------------------------------------
# Parameter construction / packing (host-side, once).
# --------------------------------------------------------------------------
def make_params(key):
    """Deterministic params mimicking PyTorch's default U(-1/sqrt(fan_in), ..) init."""
    ks = jax.random.split(key, 10)

    def unif(k, shape, fan_in):
        bound = 1.0 / np.sqrt(fan_in)
        return jax.random.uniform(k, shape, jnp.float32, -bound, bound)

    return {
        "vfc1_w": unif(ks[0], (N_HID, N_INPUT), N_INPUT),
        "vfc1_b": unif(ks[1], (N_HID,), N_INPUT),
        "vfc2_w": unif(ks[2], (1, N_HID), N_HID),
        "vfc2_b": unif(ks[3], (1,), N_HID),
        "conv1_w": unif(ks[4], (N_CONV1_OUT, N_CONV1_IN, KERNEL), N_CONV1_IN * KERNEL),
        "conv1_b": unif(ks[5], (N_CONV1_OUT,), N_CONV1_IN * KERNEL),
        "pfc1_w": unif(ks[6], (N_HID, CONV_FLAT), CONV_FLAT),
        "pfc1_b": unif(ks[7], (N_HID,), CONV_FLAT),
        "pfc2_w": unif(ks[8], (N_POLICY, N_HID), N_HID),
        "pfc2_b": unif(ks[9], (N_POLICY,), N_HID),
    }


def prepare_outblock_params(params, compute_dtype=jnp.bfloat16, elemwise_dtype=None):
    """One-time host-side packing (Toeplitz-expand conv, fuse matmuls).

    compute_dtype: dtype of the stage-1/2 matmul weights (bf16 default).
    elemwise_dtype: dtype of the stage-1 epilogue (b1 / bias+leaky).  Defaults
      to compute_dtype (bf16 -> good on v6e/v7x); pass jnp.float32 on v5e.
    Stage-3 weights/bias stay f32 (tiny matmul, avoids an extra repack).
    """
    if elemwise_dtype is None:
        elemwise_dtype = compute_dtype

    vfc1_w = np.asarray(params["vfc1_w"], np.float32)   # (32, 64)
    vfc1_b = np.asarray(params["vfc1_b"], np.float32)
    vfc2_w = np.asarray(params["vfc2_w"], np.float32)   # (1, 32)
    vfc2_b = np.asarray(params["vfc2_b"], np.float32)
    pfc1_w = np.asarray(params["pfc1_w"], np.float32)   # (32, 96)
    pfc1_b = np.asarray(params["pfc1_b"], np.float32)
    pfc2_w = np.asarray(params["pfc2_w"], np.float32)   # (4, 32)
    pfc2_b = np.asarray(params["pfc2_b"], np.float32)
    conv_w = np.asarray(params["conv1_w"], np.float32)  # (16, 8, 3)
    conv_b = np.asarray(params["conv1_b"], np.float32)

    # Conv1d(8,16,3) valid -> dense (64 -> 96) Toeplitz matmul, matching
    # PyTorch's p.view(B, -1) row-major (out_channel, position) flattening.
    big = np.zeros((N_CONV1_OUT, L_OUT, N_CONV1_IN, L_IN), np.float32)
    for t in range(L_OUT):
        big[:, t, :, t:t + KERNEL] = conv_w
    big_w = big.reshape(CONV_FLAT, N_INPUT)              # (96, 64)
    big_b = np.repeat(conv_b, L_OUT)                     # (96,)

    # Stage-1 fused weight: x(64) -> [vfc_1(32) | conv(96)] = 128 lanes.
    w1 = np.concatenate([vfc1_w.T, big_w.T], axis=1)     # (64, 128)
    b1 = np.concatenate([vfc1_b, big_b])[None, :]        # (1, 128)

    # Stage-2 fused block-diagonal weight: h(128) -> [pfc_1(32) | vfc_2(1)] = 33.
    w2 = np.zeros((N_STAGE1, N_STAGE2), np.float32)      # (128, 33)
    w2[N_HID:, 0:N_HID] = pfc1_w.T                       # conv part -> policy hidden
    w2[:N_HID, N_HID:N_HID + 1] = vfc2_w.T               # value hidden -> value
    b2 = np.concatenate([pfc1_b, vfc2_b])[None, :]       # (1, 33)

    # Stage-3 (transposed, 8 rows): row 0 passes v through, rows 1..4 = pfc_2.
    w3t = np.zeros((OUT_ROWS, N_STAGE2), np.float32)     # (8, 33)
    w3t[0, N_HID] = 1.0
    w3t[1:1 + N_POLICY, 0:N_HID] = pfc2_w
    b3t = np.zeros((OUT_ROWS, 1), np.float32)            # (8, 1)
    b3t[1:1 + N_POLICY, 0] = pfc2_b

    return {
        "w1": jnp.asarray(w1, compute_dtype),
        "b1": jnp.asarray(b1, elemwise_dtype),
        "w2": jnp.asarray(w2, compute_dtype),
        "b2": jnp.asarray(b2, jnp.float32),
        "w3t": jnp.asarray(w3t, jnp.float32),
        "b3t": jnp.asarray(b3t, jnp.float32),
    }


# --------------------------------------------------------------------------
# Forward wrapper (jit-compatible; no wrapper-side cast / pad passes over x).
# --------------------------------------------------------------------------
def _choose_tb(B, max_tb=1024, min_tb=128, target_steps=8):
    """Batch tile: aim for >= target_steps grid steps (pipeline depth, 2-TC
    sharding on v7x) with 128..1024-row tiles; never exceed the batch extent."""
    tb = _round_up(max(1, -(-B // target_steps)), 128)
    tb = max(min_tb, min(max_tb, tb))
    return min(tb, B)


def outblock_forward(x, kparams):
    """x: (B, 8, 8) (NCL, PyTorch layout), any float dtype.
    Returns (v: (B,1) f32, log_p: (B,4) f32)."""
    B = x.shape[0]
    x_flat = x.reshape(B, N_INPUT)                 # == x.view(B, -1): free view

    TB = _choose_tb(B)
    grid_b = pl.cdiv(B, TB)                        # ragged last tile is fine
    B_ceil = grid_b * TB                           # output lane extent

    def const_spec(shape):                         # VMEM-resident across grid steps
        return pl.BlockSpec(shape, lambda i: (0, 0))

    in_specs = [
        pl.BlockSpec((TB, N_INPUT), lambda i: (i, 0)),        # x batch tile
        const_spec((N_INPUT, N_STAGE1)), const_spec((1, N_STAGE1)),
        const_spec((N_STAGE1, N_STAGE2)), const_spec((1, N_STAGE2)),
        const_spec((OUT_ROWS, N_STAGE2)), const_spec((OUT_ROWS, 1)),
    ]
    out_spec = pl.BlockSpec((OUT_ROWS, TB), lambda i: (0, i))  # lane-dense output

    weight_bytes = sum(
        int(np.prod(kparams[k].shape)) * jnp.dtype(kparams[k].dtype).itemsize
        for k in ("w1", "b1", "w2", "b2", "w3t", "b3t"))
    cost = pl.CostEstimate(
        flops=2 * B_ceil * (N_INPUT * N_STAGE1 + N_STAGE1 * N_STAGE2
                            + N_STAGE2 * OUT_ROWS),
        transcendentals=(OUT_ROWS + 1) * B_ceil,
        bytes_accessed=B * N_INPUT * x.dtype.itemsize
                       + OUT_ROWS * B_ceil * 4 + weight_bytes,
    )

    out = pl.pallas_call(
        outblock_kernel,
        out_shape=jax.ShapeDtypeStruct((OUT_ROWS, B_ceil), jnp.float32),
        grid_spec=pltpu.PrefetchScalarGridSpec(
            num_scalar_prefetch=0,
            grid=(grid_b,),
            in_specs=in_specs,
            out_specs=out_spec,
        ),
        compiler_params=pltpu.CompilerParams(
            dimension_semantics=("parallel",),     # megacore / 2-TC split
        ),
        cost_estimate=cost,
    )(x_flat, kparams["w1"], kparams["b1"], kparams["w2"], kparams["b2"],
      kparams["w3t"], kparams["b3t"])

    v = out[0:1, :B].T                  # (B, 1)  — tiny wrapper-side transpose
    p = out[1:1 + N_POLICY, :B].T       # (B, 4)
    return v, p


# --------------------------------------------------------------------------
# Pure-JAX reference matching the PyTorch module semantics.
# --------------------------------------------------------------------------
def reference_forward(x, params):
    B = x.shape[0]
    xf = x.reshape(B, -1)

    def leaky(z):
        return jnp.where(z >= 0, z, NEG_SLOPE * z)

    v = leaky(xf @ params["vfc1_w"].T + params["vfc1_b"])
    v = leaky(v @ params["vfc2_w"].T + params["vfc2_b"])

    conv = jnp.stack(
        [jnp.einsum("bck,ock->bo", x[:, :, t:t + KERNEL], params["conv1_w"])
         for t in range(L_OUT)],
        axis=-1,
    ) + params["conv1_b"][None, :, None]                    # (B, 16, 6)
    p = leaky(conv.reshape(B, -1))
    p = leaky(p @ params["pfc1_w"].T + params["pfc1_b"])
    p = p @ params["pfc2_w"].T + params["pfc2_b"]
    p = jax.nn.log_softmax(p, axis=1)
    return v, p


if __name__ == "__main__":
    key = jax.random.PRNGKey(0)
    k_param, k_x1, k_x2 = jax.random.split(key, 3)

    params = make_params(k_param)
    fwd = jax.jit(outblock_forward)

    # --- small batch (B=2), f32 params: exact-semantics check ---------------
    x_small = jax.random.normal(k_x1, (2, N_CONV1_IN, L_IN), dtype=jnp.float32)
    v_ref, p_ref = reference_forward(x_small, params)

    kp_f32 = prepare_outblock_params(params, compute_dtype=jnp.float32)
    v32, p32 = fwd(x_small, kp_f32)
    jax.block_until_ready((v32, p32))
    np.testing.assert_allclose(np.asarray(v32), np.asarray(v_ref), rtol=1e-5, atol=1e-5)
    np.testing.assert_allclose(np.asarray(p32), np.asarray(p_ref), rtol=1e-5, atol=1e-5)

    # --- multi-tile batch with ragged last tile (B=300 -> TB=128, grid=3) ----
    x_med = jax.random.normal(k_x2, (300, N_CONV1_IN, L_IN), dtype=jnp.float32)
    v_refm, p_refm = reference_forward(x_med, params)
    v32m, p32m = fwd(x_med, kp_f32)
    jax.block_until_ready((v32m, p32m))
    np.testing.assert_allclose(np.asarray(v32m), np.asarray(v_refm), rtol=1e-5, atol=1e-5)
    np.testing.assert_allclose(np.asarray(p32m), np.asarray(p_refm), rtol=1e-5, atol=1e-5)

    # --- default bf16 weights + bf16 stage-1 epilogue (perf path) ------------
    kp_bf16 = prepare_outblock_params(params, compute_dtype=jnp.bfloat16)
    vbf, pbf = fwd(x_small, kp_bf16)
    jax.block_until_ready((vbf, pbf))
    np.testing.assert_allclose(np.asarray(vbf), np.asarray(v_ref), rtol=8e-2, atol=8e-2)
    np.testing.assert_allclose(np.asarray(pbf), np.asarray(p_ref), rtol=8e-2, atol=8e-2)

    print("KERNEL_OK")
</pallas_src>

<mosaic_0001>
module attributes {stable_mosaic.version = 11 : i64} {
  func.func @outblock_kernel(%arg0: i32, %arg1: memref<2x64xf32, #tpu.memory_space<vmem>>, %arg2: memref<64x128xf32, #tpu.memory_space<vmem>>, %arg3: memref<1x128xf32, #tpu.memory_space<vmem>>, %arg4: memref<128x33xf32, #tpu.memory_space<vmem>>, %arg5: memref<1x33xf32, #tpu.memory_space<vmem>>, %arg6: memref<8x33xf32, #tpu.memory_space<vmem>>, %arg7: memref<8x1xf32, #tpu.memory_space<vmem>>, %arg8: memref<8x2xf32, #tpu.memory_space<vmem>>) attributes {dimension_semantics = [#tpu.dimension_semantics<parallel>], iteration_bounds = array<i64: 1>, scalar_prefetch = 0 : i64, scratch_operands = 0 : i64, tpu.core_type = #tpu.core_type<tc>, window_params = [{transform_indices = @transform_0, window_bounds = array<i64: 2, 64>}, {pipeline_mode = #tpu.pipeline_mode<synchronous>, transform_indices = @transform_1, window_bounds = array<i64: 64, 128>}, {pipeline_mode = #tpu.pipeline_mode<synchronous>, transform_indices = @transform_2, window_bounds = array<i64: 1, 128>}, {pipeline_mode = #tpu.pipeline_mode<synchronous>, transform_indices = @transform_3, window_bounds = array<i64: 128, 33>}, {pipeline_mode = #tpu.pipeline_mode<synchronous>, transform_indices = @transform_4, window_bounds = array<i64: 1, 33>}, {pipeline_mode = #tpu.pipeline_mode<synchronous>, transform_indices = @transform_5, window_bounds = array<i64: 8, 33>}, {pipeline_mode = #tpu.pipeline_mode<synchronous>, transform_indices = @transform_6, window_bounds = array<i64: 8, 1>}, {transform_indices = @transform_7, window_bounds = array<i64: 8, 2>}]} {
    %c0 = arith.constant 0 : index
    %c0_0 = arith.constant 0 : index
    %0 = vector.load %arg1[%c0, %c0_0] : memref<2x64xf32, #tpu.memory_space<vmem>>, vector<2x64xf32>
    %c0_1 = arith.constant 0 : index
    %c0_2 = arith.constant 0 : index
    %1 = vector.load %arg2[%c0_1, %c0_2] : memref<64x128xf32, #tpu.memory_space<vmem>>, vector<64x128xf32>
    %cst = arith.constant dense<0.000000e+00> : vector<2x128xf32>
    %2 = tpu.matmul %0, %1, %cst {dimension_numbers = #tpu.dot_dimension_numbers<[1], [0], [0], [1], [0, 0, 1, 1], [], []>} : vector<2x64xf32>, vector<64x128xf32>, vector<2x128xf32> -> vector<2x128xf32>
    %c0_3 = arith.constant 0 : index
    %c0_4 = arith.constant 0 : index
    %3 = vector.load %arg3[%c0_3, %c0_4] : memref<1x128xf32, #tpu.memory_space<vmem>>, vector<1x128xf32>
    %4 = vector.broadcast %3 : vector<1x128xf32> to vector<2x128xf32>
    %5 = arith.addf %2, %4 : vector<2x128xf32>
    %cst_5 = arith.constant 0.000000e+00 : f32
    %6 = vector.broadcast %cst_5 : f32 to vector<2x128xf32>
    %7 = arith.cmpf oge, %5, %6 : vector<2x128xf32>
    %cst_6 = arith.constant 0.00999999977 : f32
    %8 = vector.broadcast %cst_6 : f32 to vector<2x128xf32>
    %9 = arith.mulf %8, %5 : vector<2x128xf32>
    %10 = arith.select %7, %5, %9 : vector<2x128xi1>, vector<2x128xf32>
    %c0_7 = arith.constant 0 : index
    %c0_8 = arith.constant 0 : index
    %11 = vector.load %arg4[%c0_7, %c0_8] : memref<128x33xf32, #tpu.memory_space<vmem>>, vector<128x33xf32>
    %cst_9 = arith.constant dense<0.000000e+00> : vector<2x33xf32>
    %12 = tpu.matmul %10, %11, %cst_9 {dimension_numbers = #tpu.dot_dimension_numbers<[1], [0], [0], [1], [0, 0, 1, 1], [], []>} : vector<2x128xf32>, vector<128x33xf32>, vector<2x33xf32> -> vector<2x33xf32>
    %c0_10 = arith.constant 0 : index
    %c0_11 = arith.constant 0 : index
    %13 = vector.load %arg5[%c0_10, %c0_11] : memref<1x33xf32, #tpu.memory_space<vmem>>, vector<1x33xf32>
    %14 = vector.broadcast %13 : vector<1x33xf32> to vector<2x33xf32>
    %15 = arith.addf %12, %14 : vector<2x33xf32>
    %cst_12 = arith.constant 0.000000e+00 : f32
    %16 = vector.broadcast %cst_12 : f32 to vector<2x33xf32>
    %17 = arith.cmpf oge, %15, %16 : vector<2x33xf32>
    %cst_13 = arith.constant 0.00999999977 : f32
    %18 = vector.broadcast %cst_13 : f32 to vector<2x33xf32>
    %19 = arith.mulf %18, %15 : vector<2x33xf32>
    %20 = arith.select %17, %15, %19 : vector<2x33xi1>, vector<2x33xf32>
    %c0_14 = arith.constant 0 : index
    %c0_15 = arith.constant 0 : index
    %21 = vector.load %arg6[%c0_14, %c0_15] : memref<8x33xf32, #tpu.memory_space<vmem>>, vector<8x33xf32>
    %cst_16 = arith.constant dense<0.000000e+00> : vector<8x2xf32>
    %22 = tpu.matmul %21, %20, %cst_16 {dimension_numbers = #tpu.dot_dimension_numbers<[1], [1], [0], [0], [0, 0, 1, 0], [], []>} : vector<8x33xf32>, vector<2x33xf32>, vector<8x2xf32> -> vector<8x2xf32>
    %c0_17 = arith.constant 0 : index
    %c0_18 = arith.constant 0 : index
    %23 = vector.load %arg7[%c0_17, %c0_18] : memref<8x1xf32, #tpu.memory_space<vmem>>, vector<8x1xf32>
    %24 = vector.broadcast %23 : vector<8x1xf32> to vector<8x2xf32>
    %25 = arith.addf %22, %24 : vector<8x2xf32>
    %26 = tpu.iota {dimensions = array<i32: 0>} : vector<8x2xi32>
    %c1_i32 = arith.constant 1 : i32
    %27 = vector.broadcast %c1_i32 : i32 to vector<8x2xi32>
    %28 = arith.cmpi sge, %26, %27 : vector<8x2xi32>
    %c5_i32 = arith.constant 5 : i32
    %29 = vector.broadcast %c5_i32 : i32 to vector<8x2xi32>
    %30 = arith.cmpi slt, %26, %29 : vector<8x2xi32>
    %31 = arith.andi %28, %30 : vector<8x2xi1>
    %cst_19 = arith.constant 0xFF800000 : f32
    %32 = vector.broadcast %cst_19 : f32 to vector<8x2xf32>
    %33 = arith.select %31, %25, %32 : vector<8x2xi1>, vector<8x2xf32>
    %cst_20 = arith.constant dense<0xFF800000> : vector<2xf32>
    %34 = vector.multi_reduction <maximumf>, %33, %cst_20 [0] : vector<8x2xf32> to vector<2xf32>
    %35 = vector.shape_cast %34 : vector<2xf32> to vector<1x2xf32>
    %36 = vector.broadcast %35 : vector<1x2xf32> to vector<8x2xf32>
    %37 = arith.subf %33, %36 : vector<8x2xf32>
    %38 = math.exp %37 : vector<8x2xf32>
    %cst_21 = arith.constant dense<0.000000e+00> : vector<2xf32>
    %39 = vector.multi_reduction <add>, %38, %cst_21 [0] : vector<8x2xf32> to vector<2xf32>
    %40 = vector.shape_cast %39 : vector<2xf32> to vector<1x2xf32>
    %41 = math.log %40 : vector<1x2xf32>
    %42 = arith.addf %35, %41 : vector<1x2xf32>
    %43 = vector.broadcast %42 : vector<1x2xf32> to vector<8x2xf32>
    %44 = arith.subf %25, %43 : vector<8x2xf32>
    %45 = arith.select %31, %44, %25 : vector<8x2xi1>, vector<8x2xf32>
    %c0_22 = arith.constant 0 : index
    %c0_23 = arith.constant 0 : index
    %46 = vector.load %arg8[%c0_22, %c0_23] : memref<8x2xf32, #tpu.memory_space<vmem>>, vector<8x2xf32>
    tpu.vector_store %arg8[%c0_22, %c0_23], %45 {strides = array<i32>} : memref<8x2xf32, #tpu.memory_space<vmem>>, vector<8x2xf32>,
    return
  }
  func.func @transform_0(%arg0: i32) -> (i32, i32) {
    %c0_i32 = arith.constant 0 : i32
    %c0_i32_0 = arith.constant 0 : i32
    return %arg0, %c0_i32 : i32, i32
  }
  func.func @transform_1(%arg0: i32) -> (i32, i32) {
    %c0_i32 = arith.constant 0 : i32
    %c0_i32_0 = arith.constant 0 : i32
    %c0_i32_1 = arith.constant 0 : i32
    return %c0_i32, %c0_i32_0 : i32, i32
  }
  func.func @transform_2(%arg0: i32) -> (i32, i32) {
    %c0_i32 = arith.constant 0 : i32
    %c0_i32_0 = arith.constant 0 : i32
    %c0_i32_1 = arith.constant 0 : i32
    return %c0_i32, %c0_i32_0 : i32, i32
  }
  func.func @transform_3(%arg0: i32) -> (i32, i32) {
    %c0_i32 = arith.constant 0 : i32
    %c0_i32_0 = arith.constant 0 : i32
    %c0_i32_1 = arith.constant 0 : i32
    return %c0_i32, %c0_i32_0 : i32, i32
  }
  func.func @transform_4(%arg0: i32) -> (i32, i32) {
    %c0_i32 = arith.constant 0 : i32
    %c0_i32_0 = arith.constant 0 : i32
    %c0_i32_1 = arith.constant 0 : i32
    return %c0_i32, %c0_i32_0 : i32, i32
  }
  func.func @transform_5(%arg0: i32) -> (i32, i32) {
    %c0_i32 = arith.constant 0 : i32
    %c0_i32_0 = arith.constant 0 : i32
    %c0_i32_1 = arith.constant 0 : i32
    return %c0_i32, %c0_i32_0 : i32, i32
  }
  func.func @transform_6(%arg0: i32) -> (i32, i32) {
    %c0_i32 = arith.constant 0 : i32
    %c0_i32_0 = arith.constant 0 : i32
    %c0_i32_1 = arith.constant 0 : i32
    return %c0_i32, %c0_i32_0 : i32, i32
  }
  func.func @transform_7(%arg0: i32) -> (i32, i32) {
    %c0_i32 = arith.constant 0 : i32
    %c0_i32_0 = arith.constant 0 : i32
    return %c0_i32, %arg0 : i32, i32
  }
}

</mosaic_0001>

<llo_original>
// kernel: outblock_forward.1
$region0: #{outblock_forward.1}
  #allocation0 [shape = 'u32[]', space=smem, size = 0x4, offset = 0x4, fixed_abs, tag = 'smem constant byte address 0x4 - core index']
  #allocation1 [shape = 'u32[144,128]{1,0:T(1,128)}', space=vmem, size = 0x12000, scoped, tag = 'internal scratch']
  %s0 = inlined_call_operand.vmem [shape: f32[2,64], index: 0, kind: input, shape index: {}]
  %s1 = inlined_call_operand.vmem [shape: f32[64,128], index: 1, kind: input, shape index: {}]
  %s2 = inlined_call_operand.vmem [shape: f32[1,128], index: 2, kind: input, shape index: {}]
  %s3 = inlined_call_operand.vmem [shape: f32[128,33], index: 3, kind: input, shape index: {}]
  %s4 = inlined_call_operand.vmem [shape: f32[1,33], index: 4, kind: input, shape index: {}]
  %s5 = inlined_call_operand.vmem [shape: f32[8,33], index: 5, kind: input, shape index: {}]
  %s6 = inlined_call_operand.vmem [shape: f32[8,1], index: 6, kind: input, shape index: {}]
  %s7 = inlined_call_operand.vmem [shape: f32[8,2], index: 7, kind: output, shape index: {}]
  %s8 = sld [smem:[#allocation0]]
  $region38: #{outblock_forward.1} parent=0
    _
  %s10 = ssub.s32 1, %s8
  %s11 = scalar_select 0, %s10, %s8
  // Predicated region
  $region2: #{outblock_forward.1} parent=0 // pred_check
    _
  $region3: #{outblock_forward.1} parent=0 // pred_check_branch
    %13 = sbr.rel (0) target = $region5
  $region4: #{outblock_forward.1} parent=0 // pred_region
    _
  $region5: #{outblock_forward.1} parent=0 // pred_fallthru
    _
  // Predicated region
  $region6: #{outblock_forward.1} parent=0 // pred_check
    _
  $region7: #{outblock_forward.1} parent=0 // pred_check_branch
    %15 = sbr.rel (0) target = $region9
  $region8: #{outblock_forward.1} parent=0 // pred_region
    _
  $region9: #{outblock_forward.1} parent=0 // pred_fallthru
    _
  // Predicated region
  $region10: #{outblock_forward.1} parent=0 // pred_check
    _
  $region11: #{outblock_forward.1} parent=0 // pred_check_branch
    %17 = sbr.rel (0) target = $region13
  $region12: #{outblock_forward.1} parent=0 // pred_region
    _
  $region13: #{outblock_forward.1} parent=0 // pred_fallthru
    _
  // Predicated region
  $region14: #{outblock_forward.1} parent=0 // pred_check
    _
  $region15: #{outblock_forward.1} parent=0 // pred_check_branch
    %19 = sbr.rel (0) target = $region17
  $region16: #{outblock_forward.1} parent=0 // pred_region
    _
  $region17: #{outblock_forward.1} parent=0 // pred_fallthru
    _
  // Predicated region
  $region18: #{outblock_forward.1} parent=0 // pred_check
    _
  $region19: #{outblock_forward.1} parent=0 // pred_check_branch
    %21 = sbr.rel (0) target = $region21
  $region20: #{outblock_forward.1} parent=0 // pred_region
    _
  $region21: #{outblock_forward.1} parent=0 // pred_fallthru
    _
  // Predicated region
  $region22: #{outblock_forward.1} parent=0 // pred_check
    _
  $region23: #{outblock_forward.1} parent=0 // pred_check_branch
    %23 = sbr.rel (0) target = $region25
  $region24: #{outblock_forward.1} parent=0 // pred_region
    _
  $region25: #{outblock_forward.1} parent=0 // pred_fallthru
    _
  // Predicated region
  $region26: #{outblock_forward.1} parent=0 // pred_check
    _
  $region27: #{outblock_forward.1} parent=0 // pred_check_branch
    %25 = sbr.rel (0) target = $region29
  $region28: #{outblock_forward.1} parent=0 // pred_region
    _
  $region29: #{outblock_forward.1} parent=0 // pred_fallthru
    _
  %v26 = vld [vmem:[%s0] sm:$0x3]
  %v27 = vld [vmem:[%s1] sm:$0xff]
  %v28 = vld [vmem:[%s1 + $0x8] sm:$0xff]
  %v29 = vld [vmem:[%s1 + $0x10] sm:$0xff]
  %v30 = vld [vmem:[%s1 + $0x18] sm:$0xff]
  %v31 = vld [vmem:[%s1 + $0x20] sm:$0xff]
  %v32 = vld [vmem:[%s1 + $0x28] sm:$0xff]
  %v33 = vld [vmem:[%s1 + $0x30] sm:$0xff]
  %v34 = vld [vmem:[%s1 + $0x38] sm:$0xff]
  %v35 = vld [vmem:[%s2] sm:$0x1]
  %v37 = vlaneseq
  %v38 = vshrl.u32 %v37, 7
  %v39 = vsub.s32 0, %v38
  %v40 = vrot.slane %v35, %v39
  %vm42 = vcmask 523264
  %v44 = vsel %vm42, %v26, 0
  %46 = vmatprep.subr.mxu0 0.0
  %47 = vmatpush1.msra.mxu0 %v27
  %48 = vmatprep.subr.mxu0 0.0
  %49 = vmatpush1.msra.mxu0 %v28
  %50 = vmatprep.subr.mxu0 0.0
  %51 = vmatpush1.msra.mxu0 %v29
  %52 = vmatprep.subr.mxu0 0.0
  %53 = vmatpush1.msra.mxu0 %v30
  %54 = vmatprep.subr.mxu0 0.0
  %55 = vmatpush1.msra.mxu0 %v31
  %56 = vmatprep.subr.mxu0 0.0
  %57 = vmatpush1.msra.mxu0 %v32
  %58 = vmatprep.subr.mxu0 0.0
  %59 = vmatpush1.msra.mxu0 %v33
  %60 = vmatprep.subr.mxu0 0.0
  %61 = vmatpush1.msra.mxu0 %v34
  %62 = vmatprep.subr.mxu0 0.0
  %63 = vmatpush1.msra.mxu0 0.0
  %64 = vmatprep.subr.mxu0 0.0
  %65 = vmatpush1.msra.mxu0 0.0
  %66 = vmatprep.subr.mxu0 0.0
  %67 = vmatpush1.msra.mxu0 0.0
  %68 = vmatprep.subr.mxu0 0.0
  %69 = vmatpush1.msra.mxu0 0.0
  %70 = vmatprep.subr.mxu0 0.0
  %71 = vmatpush1.msra.mxu0 0.0
  %72 = vmatprep.subr.mxu0 0.0
  %73 = vmatpush1.msra.mxu0 0.0
  %74 = vmatprep.subr.mxu0 0.0
  %75 = vmatpush1.msra.mxu0 0.0
  %76 = vmatprep.subr.mxu0 0.0
  %77 = vmatpush1.msra.mxu0 0.0
  %78 = vmatprep.subr.mxu0 0.0
  %79 = vmatpush1.msra.mxu0 0.0
  %80 = vmatprep.subr.mxu0 0.0
  %81 = vmatpush1.msra.mxu0 0.0
  %82 = vmatprep.subr.mxu0 0.0
  %83 = vmatpush1.msra.mxu0 0.0
  %84 = vmatprep.subr.mxu0 0.0
  %85 = vmatpush1.msra.mxu0 0.0
  %86 = vmatprep.subr.mxu0 0.0
  %87 = vmatpush1.msra.mxu0 0.0
  %88 = vmatprep.subr.mxu0 0.0
  %89 = vmatpush1.msra.mxu0 0.0
  %90 = vmatprep.subr.mxu0 0.0
  %91 = vmatpush1.msra.mxu0 0.0
  %92 = vmatprep.subr.mxu0 0.0
  %93 = vmatpush1.msra.mxu0 0.0
  %94 = vmatprep.subr.mxu0 0.0
  %95 = vmatpush1.msra.mxu0 0.0
  %96 = vmatprep.subr.mxu0 0.0
  %97 = vmatpush1.msra.mxu0 0.0
  %98 = vmatprep.subr.mxu0 0.0
  %99 = vmatpush1.msra.mxu0 0.0
  %100 = vmatprep.subr.mxu0 0.0
  %101 = vmatpush1.msra.mxu0 0.0
  %102 = vmatprep.subr.mxu0 0.0
  %103 = vmatpush1.msra.mxu0 0.0
  %104 = vmatprep.subr.mxu0 0.0
  %105 = vmatpush1.msra.mxu0 0.0
  %106 = vmatprep.subr.mxu0 0.0
  %107 = vmatpush1.msra.mxu0 0.0
  %108 = vmatprep.subr.mxu0 0.0
  %109 = vmatpush1.msra.mxu0 0.0
  %110 = vmatprep.mubr.f32.mxu0 0.0
  %111 = vmatmul.mubr.f32.gmra.mrb[0].mxu0 %v44
  %v112 = vpop.f32.mrb[0].mxu0
  %v113 = vadd.f32 %v40, %v112
  %v114 = vpop.f32.mrb[0].mxu0
  %115 = vdwg.mxu0
  %vm116 = vcmp.ge.f32.partialorder %v113, 0.0
  %v117 = vmul.f32 %v113, 0.01
  %v118 = vsel %vm116, %v113, %v117
  %v119 = vld [vmem:[%s3] sm:$0xff]
  %v120 = vld [vmem:[%s3 + $0x8] sm:$0xff]
  %v121 = vld [vmem:[%s3 + $0x10] sm:$0xff]
  %v122 = vld [vmem:[%s3 + $0x18] sm:$0xff]
  %v123 = vld [vmem:[%s3 + $0x20] sm:$0xff]
  %v124 = vld [vmem:[%s3 + $0x28] sm:$0xff]
  %v125 = vld [vmem:[%s3 + $0x30] sm:$0xff]
  %v126 = vld [vmem:[%s3 + $0x38] sm:$0xff]
  %v127 = vld [vmem:[%s3 + $0x40] sm:$0xff]
  %v128 = vld [vmem:[%s3 + $0x48] sm:$0xff]
  %v129 = vld [vmem:[%s3 + $0x50] sm:$0xff]
  %v130 = vld [vmem:[%s3 + $0x58] sm:$0xff]
  %v131 = vld [vmem:[%s3 + $0x60] sm:$0xff]
  %v132 = vld [vmem:[%s3 + $0x68] sm:$0xff]
  %v133 = vld [vmem:[%s3 + $0x70] sm:$0xff]
  %v134 = vld [vmem:[%s3 + $0x78] sm:$0xff]
  %v135 = vld [vmem:[%s4] sm:$0x1]
  %v137 = vlaneseq
  %v138 = vshrl.u32 %v137, 7
  %v139 = vsub.s32 0, %v138
  %v140 = vrot.slane %v135, %v139
  %142 = vmatprep.subr.mxu0 0.0
  %143 = vmatpush1.msra.mxu0 %v119
  %144 = vmatprep.subr.mxu0 0.0
  %145 = vmatpush1.msra.mxu0 %v120
  %146 = vmatprep.subr.mxu0 0.0
  %147 = vmatpush1.msra.mxu0 %v121
  %148 = vmatprep.subr.mxu0 0.0
  %149 = vmatpush1.msra.mxu0 %v122
  %150 = vmatprep.subr.mxu0 0.0
  %151 = vmatpush1.msra.mxu0 %v123
  %152 = vmatprep.subr.mxu0 0.0
  %153 = vmatpush1.msra.mxu0 %v124
  %154 = vmatprep.subr.mxu0 0.0
  %155 = vmatpush1.msra.mxu0 %v125
  %156 = vmatprep.subr.mxu0 0.0
  %157 = vmatpush1.msra.mxu0 %v126
  %158 = vmatprep.subr.mxu0 0.0
  %159 = vmatpush1.msra.mxu0 %v127
  %160 = vmatprep.subr.mxu0 0.0
  %161 = vmatpush1.msra.mxu0 %v128
  %162 = vmatprep.subr.mxu0 0.0
  %163 = vmatpush1.msra.mxu0 %v129
  %164 = vmatprep.subr.mxu0 0.0
  %165 = vmatpush1.msra.mxu0 %v130
  %166 = vmatprep.subr.mxu0 0.0
  %167 = vmatpush1.msra.mxu0 %v131
  %168 = vmatprep.subr.mxu0 0.0
  %169 = vmatpush1.msra.mxu0 %v132
  %170 = vmatprep.subr.mxu0 0.0
  %171 = vmatpush1.msra.mxu0 %v133
  %172 = vmatprep.subr.mxu0 0.0
  %173 = vmatpush1.msra.mxu0 %v134
  %174 = vmatprep.subr.mxu0 0.0
  %175 = vmatpush1.msra.mxu0 0.0
  %176 = vmatprep.subr.mxu0 0.0
  %177 = vmatpush1.msra.mxu0 0.0
  %178 = vmatprep.subr.mxu0 0.0
  %179 = vmatpush1.msra.mxu0 0.0
  %180 = vmatprep.subr.mxu0 0.0
  %181 = vmatpush1.msra.mxu0 0.0
  %182 = vmatprep.subr.mxu0 0.0
  %183 = vmatpush1.msra.mxu0 0.0
  %184 = vmatprep.subr.mxu0 0.0
  %185 = vmatpush1.msra.mxu0 0.0
  %186 = vmatprep.subr.mxu0 0.0
  %187 = vmatpush1.msra.mxu0 0.0
  %188 = vmatprep.subr.mxu0 0.0
  %189 = vmatpush1.msra.mxu0 0.0
  %190 = vmatprep.subr.mxu0 0.0
  %191 = vmatpush1.msra.mxu0 0.0
  %192 = vmatprep.subr.mxu0 0.0
  %193 = vmatpush1.msra.mxu0 0.0
  %194 = vmatprep.subr.mxu0 0.0
  %195 = vmatpush1.msra.mxu0 0.0
  %196 = vmatprep.subr.mxu0 0.0
  %197 = vmatpush1.msra.mxu0 0.0
  %198 = vmatprep.subr.mxu0 0.0
  %199 = vmatpush1.msra.mxu0 0.0
  %200 = vmatprep.subr.mxu0 0.0
  %201 = vmatpush1.msra.mxu0 0.0
  %202 = vmatprep.subr.mxu0 0.0
  %203 = vmatpush1.msra.mxu0 0.0
  %204 = vmatprep.subr.mxu0 0.0
  %205 = vmatpush1.msra.mxu0 0.0
  %206 = vmatprep.mubr.f32.mxu0 0.0
  %207 = vmatmul.mubr.f32.gmra.mrb[0].mxu0 %v118
  %v208 = vpop.f32.mrb[0].mxu0
  %v209 = vadd.f32 %v140, %v208
  %v210 = vpop.f32.mrb[0].mxu0
  %211 = vdwg.mxu0
  %vm212 = vcmp.ge.f32.partialorder %v209, 0.0
  %v213 = vmul.f32 %v209, 0.01
  %v214 = vsel %vm212, %v209, %v213
  %v215 = vld [vmem:[%s5] sm:$0xff]
  %v216 = vld [vmem:[%s6] sm:$0xff]
  %218 = vset.pattern.permute.xlu0 0
  %219 = vperm.xlu0 %218, %v216
  %v220 = vpop.permute.xlu0 %219
  %vm222 = vcmask 269312
  %v224 = vsel %vm222, %v215, 0
  %v227 = vsel %vm222, %v214, 0
  %229 = vmatprep.subr.mxu0 0.0
  %230 = vmatpush1.xpose.msra.mxu0 %v227
  %231 = vmatprep.subr.mxu0 0.0
  %232 = vmatpush1.xpose.msra.mxu0 0.0
  %233 = vmatprep.subr.mxu0 0.0
  %234 = vmatpush1.xpose.msra.mxu0 0.0
  %235 = vmatprep.subr.mxu0 0.0
  %236 = vmatpush1.xpose.msra.mxu0 0.0
  %237 = vmatprep.subr.mxu0 0.0
  %238 = vmatpush1.xpose.msra.mxu0 0.0
  %239 = vmatprep.subr.mxu0 0.0
  %240 = vmatpush1.xpose.msra.mxu0 0.0
  %241 = vmatprep.subr.mxu0 0.0
  %242 = vmatpush1.xpose.msra.mxu0 0.0
  %243 = vmatprep.subr.mxu0 0.0
  %244 = vmatpush1.xpose.msra.mxu0 0.0
  %245 = vmatprep.subr.mxu0 0.0
  %246 = vmatpush1.xpose.msra.mxu0 0.0
  %247 = vmatprep.subr.mxu0 0.0
  %248 = vmatpush1.xpose.msra.mxu0 0.0
  %249 = vmatprep.subr.mxu0 0.0
  %250 = vmatpush1.xpose.msra.mxu0 0.0
  %251 = vmatprep.subr.mxu0 0.0
  %252 = vmatpush1.xpose.msra.mxu0 0.0
  %253 = vmatprep.subr.mxu0 0.0
  %254 = vmatpush1.xpose.msra.mxu0 0.0
  %255 = vmatprep.subr.mxu0 0.0
  %256 = vmatpush1.xpose.msra.mxu0 0.0
  %257 = vmatprep.subr.mxu0 0.0
  %258 = vmatpush1.xpose.msra.mxu0 0.0
  %259 = vmatprep.subr.mxu0 0.0
  %260 = vmatpush1.xpose.msra.mxu0 0.0
  %261 = vmatprep.subr.mxu0 0.0
  %262 = vmatpush1.xpose.msra.mxu0 0.0
  %263 = vmatprep.subr.mxu0 0.0
  %264 = vmatpush1.xpose.msra.mxu0 0.0
  %265 = vmatprep.subr.mxu0 0.0
  %266 = vmatpush1.xpose.msra.mxu0 0.0
  %267 = vmatprep.subr.mxu0 0.0
  %268 = vmatpush1.xpose.msra.mxu0 0.0
  %269 = vmatprep.subr.mxu0 0.0
  %270 = vmatpush1.xpose.msra.mxu0 0.0
  %271 = vmatprep.subr.mxu0 0.0
  %272 = vmatpush1.xpose.msra.mxu0 0.0
  %273 = vmatprep.subr.mxu0 0.0
  %274 = vmatpush1.xpose.msra.mxu0 0.0
  %275 = vmatprep.subr.mxu0 0.0
  %276 = vmatpush1.xpose.msra.mxu0 0.0
  %277 = vmatprep.subr.mxu0 0.0
  %278 = vmatpush1.xpose.msra.mxu0 0.0
  %279 = vmatprep.subr.mxu0 0.0
  %280 = vmatpush1.xpose.msra.mxu0 0.0
  %281 = vmatprep.subr.mxu0 0.0
  %282 = vmatpush1.xpose.msra.mxu0 0.0
  %283 = vmatprep.subr.mxu0 0.0
  %284 = vmatpush1.xpose.msra.mxu0 0.0
  %285 = vmatprep.subr.mxu0 0.0
  %286 = vmatpush1.xpose.msra.mxu0 0.0
  %287 = vmatprep.subr.mxu0 0.0
  %288 = vmatpush1.xpose.msra.mxu0 0.0
  %289 = vmatprep.subr.mxu0 0.0
  %290 = vmatpush1.xpose.msra.mxu0 0.0
  %291 = vmatprep.subr.mxu0 0.0
  %292 = vmatpush1.xpose.msra.mxu0 0.0
  %293 = vmatprep.mubr.f32.mxu0 0.0
  %294 = vmatmul.mubr.f32.gmra.mrb[0].mxu0 %v224
  %v295 = vpop.f32.mrb[0].mxu0
  %v296 = vadd.f32 %v220, %v295
  %v297 = vpop.f32.mrb[0].mxu0
  %298 = vdwg.mxu0
  %v299 = vlaneseq
  %v300 = vshrl.u32 %v299, 7
  %vm301 = vcmp.ge.s32.totalorder %v300, 1
  %vm302 = vcmp.lt.s32.totalorder %v300, 5
  %vm303 = vmand %vm301, %vm302
  %v304 = vsel %vm303, %v296, -inf
  %vm305 = vcmask 15360
  %v306 = vsel %vm305, %v304, -inf
  %v307 = vrot.slane %v306, 4
  %v308 = vmax.f32 %v306, %v307
  %v309 = vrot.slane %v308, 2
  %v310 = vmax.f32 %v308, %v309
  %v311 = vrot.slane %v310, 1
  %v312 = vmax.f32 %v310, %v311
  %v313 = vsub.f32 %v304, %v312
  %v314 = vmul.f32 %v313, 1.442695
  %v315 = vpow.pop %v314
  %v316 = vsel %vm305, %v315, 0.0
  %v317 = vrot.slane %v316, 4
  %v318 = vadd.f32 %v316, %v317
  %v319 = vrot.slane %v318, 2
  %v320 = vadd.f32 %v318, %v319
  %v321 = vrot.slane %v320, 1
  %v322 = vadd.f32 %v320, %v321
  %v323 = vlog2.pop %v322
  %v324 = vmul.f32 %v323, 0.6931472
  %v325 = vadd.f32 %v312, %v324
  %v326 = vsub.f32 %v296, %v325
  %v327 = vsel %vm303, %v326, %v296
  %328 = vst.msk [vmem:[%s7] sm:$0xff] %vm305, %v327
  // Predicated region
  $region30: #{outblock_forward.1} parent=0 // pred_check
    _
  $region31: #{outblock_forward.1} parent=0 // pred_check_branch
    %330 = sbr.rel (0) target = $region33
  $region32: #{outblock_forward.1} parent=0 // pred_region
    _
  $region33: #{outblock_forward.1} parent=0 // pred_fallthru
    _
  // Predicated region
  $region34: #{outblock_forward.1} parent=0 // pred_check
    _
  $region35: #{outblock_forward.1} parent=0 // pred_check_branch
    %332 = sbr.rel (0) target = $region37
  $region36: #{outblock_forward.1} parent=0 // pred_region
    _
  $region37: #{outblock_forward.1} parent=0 // pred_fallthru
    _

</llo_original>
